<compile_context>
chip_gen: v6e
topology: v6e:2x2x1
jax: 0.10.0
libtpu: 0.0.40
codegen_flags: <defaults>
</compile_context>

<pallas_src>
import jax
import jax.numpy as jnp
from jax import lax
from jax.experimental import pallas as pl
from jax.experimental.pallas import tpu as pltpu

F32 = jnp.float32
BF16 = jnp.bfloat16
LN_EPS = 1e-5


# ----------------------------------------------------------------------------
# Hardware-aware knobs
# ----------------------------------------------------------------------------
def _round_up(x, m):
    return ((x + m - 1) // m) * m


def _vmem_limit_bytes():
    try:
        cap = int(pltpu.get_tpu_info().vmem_capacity_bytes)
    except Exception:
        cap = 64 * 1024 * 1024
    return max(int(cap * 0.85), 32 * 1024 * 1024)


_VMEM_LIMIT = _vmem_limit_bytes()


def _is_dual_tc():
    """Chips with 2 TensorCores (megacore / v7x style): prefer >=2 batch shards."""
    try:
        kind = jax.devices()[0].device_kind.lower()
    except Exception:
        return False
    return any(t in kind for t in ("v7", "7x", "v5p", "v4"))


def _probe_single_buffer():
    """pl.Buffered(1) (single-buffered BlockSpecs) support varies; probe once."""
    if not hasattr(pl, "Buffered"):
        return False
    try:
        def _k(x_ref, o_ref):
            o_ref[...] = x_ref[...] + 1.0

        x = jnp.arange(16 * 128, dtype=F32).reshape(16, 128)
        fn = pl.pallas_call(
            _k,
            grid=(2,),
            in_specs=[pl.BlockSpec((8, 128), lambda i: (i, 0),
                                   pipeline_mode=pl.Buffered(1))],
            out_specs=pl.BlockSpec((8, 128), lambda i: (i, 0)),
            out_shape=jax.ShapeDtypeStruct((16, 128), F32),
        )
        out = jax.block_until_ready(fn(x))
        return bool(jnp.allclose(out, x + 1.0))
    except Exception:
        return False


_SINGLE_BUFFER_OK = _probe_single_buffer()


def _block_spec(block_shape, index_map, *, single_buffer=False):
    if single_buffer and _SINGLE_BUFFER_OK:
        return pl.BlockSpec(block_shape, index_map, pipeline_mode=pl.Buffered(1))
    return pl.BlockSpec(block_shape, index_map)


def _per_layer_spec(arr):
    trail = arr.shape[1:]
    nz = len(trail)
    return pl.BlockSpec((1,) + trail, lambda b, l, _n=nz: (l,) + (0,) * _n)


# ----------------------------------------------------------------------------
# VMEM model -> (b_tile, chunk_b) plan for the fused transformer stack
# ----------------------------------------------------------------------------
def _stack_vmem_bytes(b_tile, cb, S, D, H, Dm, use_mask, want_final, nbuf):
    f4, f2 = 4, 2
    wmat = f2 * (3 * D * D + D * D + 2 * D * Dm)      # bf16 matmul weights / layer
    wvec = f4 * (3 * D + D + Dm + D + 4 * D)          # f32 biases + LN params / layer
    fixed = 2 * (wmat + wvec)                          # double-buffered weight stream
    fixed += nbuf * (S * D * f4 + (S * S * f4 if use_mask else 0) + 8 * D * f4)
    fixed += 6 << 20                                   # compiler / misc headroom
    per_b = S * D * f4                                 # resident activation scratch
    per_b += nbuf * S * D * f2                         # bf16 x0 input buffer(s)
    per_b += (2 * S * D * f4) if want_final else (2 * D * f4)
    per_c = 2 * S * D * f4                             # x chunk + residual temps
    per_c += S * 3 * D * (f4 + f2)                     # qkv f32 + bf16 q/k/v
    per_c += 3 * H * S * S * f4                        # scores / exp / probs
    per_c += S * D * (f4 + 2 * f2)                     # attention context paths
    per_c += S * Dm * (f4 + f2) + S * D * f4           # MLP hidden + proj
    return fixed + b_tile * per_b + cb * per_c


def _plan_stack_tiling(B, S, D, H, Dm, use_mask, want_final):
    """Largest (b_tile, chunk_b) that fits the VMEM budget.  b_tile divides B,
    chunk_b divides b_tile; on dual-TC chips keep >=2 batch shards so both
    TensorCores are used whenever B >= 2."""
    nbuf = 1 if _SINGLE_BUFFER_OK else 2
    budget = _VMEM_LIMIT
    cands = [d for d in range(min(B, 32), 0, -1) if B % d == 0]
    if _is_dual_tc() and B >= 2:
        split = [d for d in cands if (B // d) >= 2]
        if split:
            cands = split
    for bt in cands:
        for cb in range(bt, 0, -1):
            if bt % cb:
                continue
            if _stack_vmem_bytes(bt, cb, S, D, H, Dm,
                                 use_mask, want_final, nbuf) <= budget:
                return bt, cb
    return 1, 1


# ----------------------------------------------------------------------------
# In-kernel helpers
# ----------------------------------------------------------------------------
def _layer_norm(x, w, b):
    mu = jnp.mean(x, axis=-1, keepdims=True)
    xc = x - mu
    var = jnp.mean(xc * xc, axis=-1, keepdims=True)
    return xc * lax.rsqrt(var + LN_EPS) * w + b


def _gelu_exact(x):
    # nn.GELU default (approximate='none'): 0.5 * x * (1 + erf(x / sqrt(2)))
    return 0.5 * x * (1.0 + lax.erf(x * (1.0 / jnp.sqrt(2.0))))


# ----------------------------------------------------------------------------
# Fused transformer-stack kernel: grid = (batch_shards, layers)
# ----------------------------------------------------------------------------
def _make_stack_kernel(num_heads, use_mask, prologue_ln, epilogue_ln,
                       tap_every, want_final, n_chunks, chunk_b):
    def kernel(*refs):
        refs = list(refs)
        x0_ref = refs.pop(0)
        pos_ref = refs.pop(0)
        lnp_w_ref = lnp_b_ref = None
        if prologue_ln:
            lnp_w_ref = refs.pop(0)
            lnp_b_ref = refs.pop(0)
        lnf_w_ref = lnf_b_ref = None
        if epilogue_ln:
            lnf_w_ref = refs.pop(0)
            lnf_b_ref = refs.pop(0)
        mask_ref = refs.pop(0) if use_mask else None
        (ln1_w_ref, ln1_b_ref, in_w_ref, in_b_ref,
         out_w_ref, out_b_ref, ln2_w_ref, ln2_b_ref,
         fc_w_ref, fc_b_ref, pj_w_ref, pj_b_ref) = refs[:12]
        refs = refs[12:]
        cls_ref = refs.pop(0) if tap_every is not None else None
        y_ref = refs.pop(0) if want_final else None
        x_scr = refs.pop(0)                      # (b_tile, S, D) f32, layer-resident

        layer = pl.program_id(1)
        last_layer = pl.num_programs(1) - 1
        _, S, D = x_scr.shape
        H = num_heads
        hd = D // H
        cb = chunk_b
        R = cb * S

        def layer_chunk(off):
            sl = pl.ds(off, cb)

            # ---- fused prologue: + positional embedding [+ ln_pre] ----
            @pl.when(layer == 0)
            def _():
                x0 = x0_ref[sl, :, :].astype(F32) + pos_ref[...]
                if prologue_ln:
                    x0 = _layer_norm(x0, lnp_w_ref[...], lnp_b_ref[...])
                x_scr[sl, :, :] = x0

            x = x_scr[sl, :, :]                                  # (cb, S, D) f32

            # ---- attention branch: x + out_proj(MHA(ln_1(x))) ----
            y2 = _layer_norm(x, ln1_w_ref[0], ln1_b_ref[0]).reshape(R, D).astype(BF16)
            # q-scale (hd**-0.5) is folded into in_w / in_b at parameter build time.
            qkv = jnp.dot(y2, in_w_ref[0],
                          preferred_element_type=F32) + in_b_ref[0]   # (R, 3D) f32
            # group layout (H, cb, S, hd): one sublane transpose + pure reshapes
            qg = jnp.swapaxes(qkv[:, :D].reshape(R, H, hd), 0, 1) \
                    .reshape(H * cb, S, hd).astype(BF16)
            kg = jnp.swapaxes(qkv[:, D:2 * D].reshape(R, H, hd), 0, 1) \
                    .reshape(H * cb, S, hd).astype(BF16)
            vg = jnp.swapaxes(qkv[:, 2 * D:].reshape(R, H, hd), 0, 1) \
                    .reshape(H * cb, S, hd).astype(BF16)
            # TODO(synk): QK^T / P.V contract over hd (typically 64) -> <=25% MXU
            # depth on v6e/v7x; audit the bundle before restructuring.
            scores = lax.dot_general(qg, kg, (((2,), (2,)), ((0,), (0,))),
                                     preferred_element_type=F32)      # (H*cb, S, S)
            if use_mask:
                scores = scores + mask_ref[...][None, :, :]
            m = jnp.max(scores, axis=-1, keepdims=True)
            e = jnp.exp(scores - m)
            p = (e * pl.reciprocal(jnp.sum(e, axis=-1, keepdims=True),
                                   approx=True)).astype(BF16)
            ctx = lax.dot_general(p, vg, (((2,), (1,)), ((0,), (0,))),
                                  preferred_element_type=F32)         # (H*cb, S, hd)
            ctx = jnp.swapaxes(ctx.reshape(H, R, hd), 0, 1).reshape(R, D).astype(BF16)
            attn_out = jnp.dot(ctx, out_w_ref[0],
                               preferred_element_type=F32) + out_b_ref[0]
            x = x + attn_out.reshape(cb, S, D)

            # ---- MLP branch: x + c_proj(gelu(c_fc(ln_2(x)))) ----
            y2 = _layer_norm(x, ln2_w_ref[0], ln2_b_ref[0]).reshape(R, D).astype(BF16)
            h1 = jnp.dot(y2, fc_w_ref[0],
                         preferred_element_type=F32) + fc_b_ref[0]
            h1 = _gelu_exact(h1).astype(BF16)
            h2 = jnp.dot(h1, pj_w_ref[0],
                         preferred_element_type=F32) + pj_b_ref[0]
            xn = x + h2.reshape(cb, S, D)
            x_scr[sl, :, :] = xn

            if tap_every is not None:
                @pl.when((layer + 1) % tap_every == 0)
                def _():
                    cls_ref[sl, :, :] = xn[:, 0:1, :]        # CLS token after layer

            if want_final:
                @pl.when(layer == last_layer)
                def _():
                    xf = xn
                    if epilogue_ln:
                        xf = _layer_norm(xf, lnf_w_ref[...], lnf_b_ref[...])
                    y_ref[sl, :, :] = xf.astype(y_ref.dtype)

        if n_chunks == 1:
            layer_chunk(0)
        else:
            # Real loop (not unrolled) so chunk intermediates' live ranges are
            # bounded -> per-layer f32 temps stay a few MB even on v7x (64 MiB).
            def body(ci, carry):
                layer_chunk(pl.multiple_of(ci * cb, cb))
                return carry

            lax.fori_loop(0, n_chunks, body, 0)

    return kernel


def transformer_stack(x0, w, heads, *, pos, mask=None, prologue_ln=False,
                      epilogue_ln=False, tap_every=None, want_final=True,
                      ln_pre=None, ln_final=None, plan=None):
    """Run all residual attention blocks on a batch-first (B, S, D) activation.

    Returns (final (B,S,D) f32 or None, cls taps (B, L//tap_every, D) f32 or None).
    """
    B, S, D = x0.shape
    L = w["in_w"].shape[0]
    Dm = w["fc_w"].shape[-1]
    use_mask = mask is not None
    tap = tap_every is not None
    n_taps = (L // tap_every) if tap else 0
    if tap:
        assert n_taps >= 1

    if plan is None:
        b_tile, cb = _plan_stack_tiling(B, S, D, heads, Dm, use_mask, want_final)
    else:
        b_tile, cb = plan
    assert B % b_tile == 0 and b_tile % cb == 0
    nb = B // b_tile
    n_chunks = b_tile // cb

    args = [x0, pos]
    in_specs = [
        _block_spec((b_tile, S, D), lambda b, l: (b, 0, 0), single_buffer=True),
        _block_spec((S, D), lambda b, l: (0, 0), single_buffer=True),
    ]
    if prologue_ln:
        args += [ln_pre[0], ln_pre[1]]
        in_specs += [_block_spec((1, D), lambda b, l: (0, 0), single_buffer=True)] * 2
    if epilogue_ln:
        args += [ln_final[0], ln_final[1]]
        in_specs += [_block_spec((1, D), lambda b, l: (0, 0), single_buffer=True)] * 2
    if use_mask:
        args.append(mask)
        in_specs.append(_block_spec((S, S), lambda b, l: (0, 0), single_buffer=True))

    weight_args = (w["ln1_w"], w["ln1_b"], w["in_w"], w["in_b"],
                   w["out_w"], w["out_b"], w["ln2_w"], w["ln2_b"],
                   w["fc_w"], w["fc_b"], w["pj_w"], w["pj_b"])
    args.extend(weight_args)
    in_specs.extend(_per_layer_spec(a) for a in weight_args)

    out_specs = []
    out_shape = []
    if tap:
        out_specs.append(pl.BlockSpec(
            (b_tile, 1, D),
            lambda b, l: (b, jnp.minimum(l // tap_every, n_taps - 1), 0)))
        out_shape.append(jax.ShapeDtypeStruct((B, n_taps, D), F32))
    if want_final:
        out_specs.append(pl.BlockSpec((b_tile, S, D), lambda b, l: (b, 0, 0)))
        out_shape.append(jax.ShapeDtypeStruct((B, S, D), F32))

    outs = pl.pallas_call(
        _make_stack_kernel(heads, use_mask, prologue_ln, epilogue_ln,
                           tap_every, want_final, n_chunks, cb),
        grid=(nb, L),
        in_specs=in_specs,
        out_specs=out_specs,
        out_shape=out_shape,
        scratch_shapes=[pltpu.VMEM((b_tile, S, D), F32)],
        compiler_params=pltpu.CompilerParams(
            dimension_semantics=("parallel", "arbitrary"),
            vmem_limit_bytes=_VMEM_LIMIT),
    )(*args)

    outs = list(outs)
    cls_all = outs.pop(0) if tap else None
    x_final = outs.pop(0) if want_final else None
    return x_final, cls_all


# ----------------------------------------------------------------------------
# Row-tiled matmul with the RHS fully resident (patch embed, text projection).
# A rows are padded to the tile -> no full-extent fallback blocks.
# ----------------------------------------------------------------------------
def _matmul_kernel(a_ref, b_ref, o_ref):
    o_ref[...] = jnp.dot(a_ref[...].astype(BF16), b_ref[...],
                         preferred_element_type=F32).astype(o_ref.dtype)


def pallas_matmul(a, b, *, tm=512, out_dtype=F32):
    M, K = a.shape
    Kb, N = b.shape
    assert K == Kb
    b = b.astype(BF16)
    tm = min(tm, _round_up(M, 8))
    Mp = _round_up(M, tm)
    if Mp != M:
        a = jnp.pad(a, ((0, Mp - M), (0, 0)))
    out = pl.pallas_call(
        _matmul_kernel,
        grid=(Mp // tm,),
        in_specs=[pl.BlockSpec((tm, K), lambda i: (i, 0)),
                  _block_spec((K, N), lambda i: (0, 0), single_buffer=True)],
        out_specs=pl.BlockSpec((tm, N), lambda i: (i, 0)),
        out_shape=jax.ShapeDtypeStruct((Mp, N), out_dtype),
        compiler_params=pltpu.CompilerParams(
            dimension_semantics=("parallel",),
            vmem_limit_bytes=_VMEM_LIMIT),
    )(a, b)
    return out[:M] if Mp != M else out


# ----------------------------------------------------------------------------
# Model glue (plain JAX) around the Pallas kernels
# ----------------------------------------------------------------------------
def l2norm(x, eps=1e-12):
    n = jnp.sqrt(jnp.sum(x * x, axis=-1, keepdims=True))
    return x / jnp.maximum(n, eps)


def encode_image(image, p):
    # image: (B, 3, H, W) NCHW
    B, C, Hh, Ww = image.shape
    P = p["patch_size"]
    Gh, Gw = Hh // P, Ww // P
    D = p["width"]
    # Conv2d(kernel=stride=P, no bias) == patchify + matmul (weight resident).
    patches = image.reshape(B, C, Gh, P, Gw, P).transpose(0, 2, 4, 1, 3, 5)
    patches = patches.reshape(B * Gh * Gw, C * P * P).astype(BF16)
    x = pallas_matmul(patches, p["conv_w"], out_dtype=BF16).reshape(B, Gh * Gw, D)
    cls = jnp.broadcast_to(p["class_embedding"].astype(BF16), (B, 1, D))
    x0 = jnp.concatenate([cls, x], axis=1)                       # (B, S, D) bf16
    # pos-add + ln_pre are fused into the stack kernel's layer-0 prologue.
    _, cls_all = transformer_stack(
        x0, p["blocks"], p["heads"], pos=p["positional_embedding"],
        mask=None, prologue_ln=True, epilogue_ln=False,
        tap_every=4, want_final=False,
        ln_pre=(p["ln_pre_w"], p["ln_pre_b"]))
    # VisualTransformer.forward returns CLS features after every 4th layer
    # (ln_post / proj exist in the module but are unused by forward()).
    return cls_all                                               # (B, L//4, D)


def encode_text(text, p):
    # text: (B, S) int token ids
    B, S = text.shape
    x0 = p["token_embedding"][text]                              # (B, S, D) bf16 gather
    # Causal additive mask, matches torch triu_(1) of -inf (safe: diag unmasked).
    mask = jnp.triu(jnp.full((S, S), -jnp.inf, F32), k=1)
    # pos-add fused in the prologue; ln_final fused in the last-layer epilogue.
    x_final, _ = transformer_stack(
        x0, p["blocks"], p["heads"], pos=p["positional_embedding"],
        mask=mask, prologue_ln=False, epilogue_ln=True,
        tap_every=None, want_final=True,
        ln_final=(p["ln_final_w"], p["ln_final_b"]))             # (B, S, D) f32
    # pooling == 'max_token_id' (causal mask, no cls token): argmax of token ids
    pool_ids = jnp.argmax(text, axis=-1)
    pooled = x_final[jnp.arange(B), pool_ids]                    # (B, D)
    return pallas_matmul(pooled, p["text_projection"])           # (B, embed_dim)


def diht_forward(image, text, params):
    image_features = l2norm(encode_image(image, params["visual"]))
    text_features = l2norm(encode_text(text, params["text"]))
    return image_features, text_features, jnp.exp(params["logit_scale"])


# ----------------------------------------------------------------------------
# Deterministic synthetic parameter initialization
# (matmul weights bf16 / pre-transposed (in,out); LN params + biases f32)
# ----------------------------------------------------------------------------
def init_block_stack(key, L, D, Dm, heads, attn_std, proj_std, fc_std):
    ks = jax.random.split(key, 4)
    in_w = attn_std * jax.random.normal(ks[0], (L, D, 3 * D), F32)
    # Fold the MHA q-scaling (head_dim**-0.5) into the q columns of the packed
    # in-proj weight (and bias; zero here) so the kernel skips the multiply.
    q_scale = (D // heads) ** -0.5
    in_w = in_w.at[:, :, :D].multiply(q_scale)
    return dict(
        ln1_w=jnp.ones((L, 1, D), F32), ln1_b=jnp.zeros((L, 1, D), F32),
        in_w=in_w.astype(BF16),
        in_b=jnp.zeros((L, 1, 3 * D), F32),
        out_w=(proj_std * jax.random.normal(ks[1], (L, D, D), F32)).astype(BF16),
        out_b=jnp.zeros((L, 1, D), F32),
        ln2_w=jnp.ones((L, 1, D), F32), ln2_b=jnp.zeros((L, 1, D), F32),
        fc_w=(fc_std * jax.random.normal(ks[2], (L, D, Dm), F32)).astype(BF16),
        fc_b=jnp.zeros((L, 1, Dm), F32),
        pj_w=(proj_std * jax.random.normal(ks[3], (L, Dm, D), F32)).astype(BF16),
        pj_b=jnp.zeros((L, 1, D), F32),
    )


def init_params(key, *, embed_dim, v_width, v_heads, v_layers, v_patch, image_size,
                t_width, t_heads, t_layers, t_ctx, vocab, mlp_ratio=4.0):
    kv, kt, k1, k2, k3, k4, k5 = jax.random.split(key, 7)
    Gh = image_size // v_patch
    v_scale = v_width ** -0.5
    v_Dm = int(v_width * mlp_ratio)
    t_Dm = int(t_width * mlp_ratio)

    visual = dict(
        patch_size=v_patch, width=v_width, heads=v_heads,
        # flattened / transposed PyTorch conv weight: (3*P*P, width)
        conv_w=(0.02 * jax.random.normal(k1, (3 * v_patch * v_patch, v_width),
                                         F32)).astype(BF16),
        class_embedding=v_scale * jax.random.normal(k2, (v_width,), F32),
        positional_embedding=v_scale * jax.random.normal(k3, (Gh * Gh + 1, v_width), F32),
        ln_pre_w=jnp.ones((1, v_width), F32), ln_pre_b=jnp.zeros((1, v_width), F32),
        blocks=init_block_stack(kv, v_layers, v_width, v_Dm, v_heads,
                                v_width ** -0.5,
                                (v_width ** -0.5) * ((2 * v_layers) ** -0.5),
                                (2 * v_width) ** -0.5),
    )
    text = dict(
        width=t_width, heads=t_heads,
        token_embedding=(0.02 * jax.random.normal(k4, (vocab, t_width), F32)).astype(BF16),
        positional_embedding=0.01 * jax.random.normal(k5, (t_ctx, t_width), F32),
        blocks=init_block_stack(kt, t_layers, t_width, t_Dm, t_heads,
                                t_width ** -0.5,
                                (t_width ** -0.5) * ((2 * t_layers) ** -0.5),
                                (2 * t_width) ** -0.5),
        ln_final_w=jnp.ones((1, t_width), F32), ln_final_b=jnp.zeros((1, t_width), F32),
        text_projection=((t_width ** -0.5) * jax.random.normal(
            jax.random.fold_in(key, 99), (t_width, embed_dim), F32)).astype(BF16),
    )
    return dict(visual=visual, text=text,
                logit_scale=jnp.asarray(jnp.log(1.0 / 0.07), F32))


# ----------------------------------------------------------------------------
if __name__ == "__main__":
    key = jax.random.PRNGKey(0)
    k_par, k_img, k_txt = jax.random.split(key, 3)

    # Small synthetic DiHT config:
    #   embed_dim=16; vision: width=32, 4 heads, 4 layers, patch 4, image 8x8
    #   text: ctx=8, vocab=64, width=32, 4 heads, 4 layers, causal mask,
    #   'max_token_id' pooling.
    params = init_params(
        k_par,
        embed_dim=16,
        v_width=32, v_heads=4, v_layers=4, v_patch=4, image_size=8,
        t_width=32, t_heads=4, t_layers=4, t_ctx=8, vocab=64,
    )

    image = jax.random.normal(k_img, (2, 3, 8, 8), F32)          # NCHW
    text = jax.random.randint(k_txt, (2, 8), 1, 64, dtype=jnp.int32)

    image_features, text_features, logit_scale = diht_forward(image, text, params)
    jax.block_until_ready((image_features, text_features, logit_scale))

    assert image_features.shape == (2, 1, 32)   # (B, layers//4, vision_width)
    assert text_features.shape == (2, 16)       # (B, embed_dim)
    assert logit_scale.shape == ()

    # Exercise the multi-b-shard and in-kernel chunked (n_chunks > 1) paths at
    # tiny shapes and check the tiling plan does not change the math.
    tp = params["text"]
    x_dbg = tp["token_embedding"][text]
    o_a, _ = transformer_stack(x_dbg, tp["blocks"], tp["heads"],
                               pos=tp["positional_embedding"], plan=(1, 1))
    o_b, _ = transformer_stack(x_dbg, tp["blocks"], tp["heads"],
                               pos=tp["positional_embedding"], plan=(2, 1))
    jax.block_until_ready((o_a, o_b))
    assert bool(jnp.allclose(o_a, o_b, atol=1e-3, rtol=1e-3))

    print("KERNEL_OK")
</pallas_src>

<mosaic_0001>
module attributes {stable_mosaic.version = 11 : i64} {
  func.func @_k(%arg0: i32, %arg1: memref<8x128xf32, #tpu.memory_space<vmem>>, %arg2: memref<8x128xf32, #tpu.memory_space<vmem>>) attributes {dimension_semantics = [#tpu.dimension_semantics<arbitrary>], iteration_bounds = array<i64: 2>, scalar_prefetch = 0 : i64, scratch_operands = 0 : i64, tpu.core_type = #tpu.core_type<tc>, window_params = [{pipeline_mode = #tpu.pipeline_mode<synchronous>, transform_indices = @transform_0, window_bounds = array<i64: 8, 128>}, {transform_indices = @transform_1, window_bounds = array<i64: 8, 128>}]} {
    %c0 = arith.constant 0 : index
    %c0_0 = arith.constant 0 : index
    %0 = vector.load %arg1[%c0, %c0_0] : memref<8x128xf32, #tpu.memory_space<vmem>>, vector<8x128xf32>
    %cst = arith.constant 1.000000e+00 : f32
    %1 = vector.broadcast %cst : f32 to vector<8x128xf32>
    %2 = arith.addf %0, %1 : vector<8x128xf32>
    %c0_1 = arith.constant 0 : index
    %c0_2 = arith.constant 0 : index
    %3 = vector.load %arg2[%c0_1, %c0_2] : memref<8x128xf32, #tpu.memory_space<vmem>>, vector<8x128xf32>
    tpu.vector_store %arg2[%c0_1, %c0_2], %2 {strides = array<i32>} : memref<8x128xf32, #tpu.memory_space<vmem>>, vector<8x128xf32>,
    return
  }
  func.func @transform_0(%arg0: i32) -> (i32, i32) {
    %c0_i32 = arith.constant 0 : i32
    %c0_i32_0 = arith.constant 0 : i32
    return %arg0, %c0_i32 : i32, i32
  }
  func.func @transform_1(%arg0: i32) -> (i32, i32) {
    %c0_i32 = arith.constant 0 : i32
    %c0_i32_0 = arith.constant 0 : i32
    return %arg0, %c0_i32 : i32, i32
  }
}

module attributes {stable_mosaic.version = 11 : i64} {
  func.func @_matmul_kernel(%arg0: i32, %arg1: memref<8x48xbf16, #tpu.memory_space<vmem>>, %arg2: memref<48x32xbf16, #tpu.memory_space<vmem>>, %arg3: memref<8x32xbf16, #tpu.memory_space<vmem>>) attributes {dimension_semantics = [#tpu.dimension_semantics<parallel>], iteration_bounds = array<i64: 1>, scalar_prefetch = 0 : i64, scratch_operands = 0 : i64, tpu.core_type = #tpu.core_type<tc>, window_params = [{transform_indices = @transform_0, window_bounds = array<i64: 8, 48>}, {pipeline_mode = #tpu.pipeline_mode<synchronous>, transform_indices = @transform_1, window_bounds = array<i64: 48, 32>}, {transform_indices = @transform_2, window_bounds = array<i64: 8, 32>}]} {
    %c0 = arith.constant 0 : index
    %c0_0 = arith.constant 0 : index
    %0 = vector.load %arg1[%c0, %c0_0] : memref<8x48xbf16, #tpu.memory_space<vmem>>, vector<8x48xbf16>
    %c0_1 = arith.constant 0 : index
    %c0_2 = arith.constant 0 : index
    %1 = vector.load %arg2[%c0_1, %c0_2] : memref<48x32xbf16, #tpu.memory_space<vmem>>, vector<48x32xbf16>
    %cst = arith.constant dense<0.000000e+00> : vector<8x32xf32>
    %2 = tpu.matmul %0, %1, %cst {dimension_numbers = #tpu.dot_dimension_numbers<[1], [0], [0], [1], [0, 0, 1, 1], [], []>} : vector<8x48xbf16>, vector<48x32xbf16>, vector<8x32xf32> -> vector<8x32xf32>
    %3 = arith.truncf %2 : vector<8x32xf32> to vector<8x32xbf16>
    %c0_3 = arith.constant 0 : index
    %c0_4 = arith.constant 0 : index
    %4 = vector.load %arg3[%c0_3, %c0_4] : memref<8x32xbf16, #tpu.memory_space<vmem>>, vector<8x32xbf16>
    tpu.vector_store %arg3[%c0_3, %c0_4], %3 {strides = array<i32>} : memref<8x32xbf16, #tpu.memory_space<vmem>>, vector<8x32xbf16>,
    return
  }
  func.func @transform_0(%arg0: i32) -> (i32, i32) {
    %c0_i32 = arith.constant 0 : i32
    %c0_i32_0 = arith.constant 0 : i32
    return %arg0, %c0_i32 : i32, i32
  }
  func.func @transform_1(%arg0: i32) -> (i32, i32) {
    %c0_i32 = arith.constant 0 : i32
    %c0_i32_0 = arith.constant 0 : i32
    %c0_i32_1 = arith.constant 0 : i32
    return %c0_i32, %c0_i32_0 : i32, i32
  }
  func.func @transform_2(%arg0: i32) -> (i32, i32) {
    %c0_i32 = arith.constant 0 : i32
    %c0_i32_0 = arith.constant 0 : i32
    return %arg0, %c0_i32 : i32, i32
  }
}

</mosaic_0001>

<llo_original>
// kernel: tpu_custom_call.1
$region0: #{tpu_custom_call.1}
  #allocation0 [shape = 'u32[]', space=smem, size = 0x4, offset = 0x4, fixed_abs, tag = 'smem constant byte address 0x4 - core index']
  #allocation1 [shape = 'u32[144,128]{1,0:T(1,128)}', space=vmem, size = 0x12000, scoped, tag = 'internal scratch']
  %s0 = inlined_call_operand.hbm [shape: f32[16,128], index: 0, kind: input, shape index: {}]
  %s1 = inlined_call_operand.hbm [shape: f32[16,128], index: 1, kind: output, shape index: {}]
  %s2 = sld [smem:[#allocation0]]
  $region41: #{tpu_custom_call.1} parent=0
    _
  %s4 = ssub.s32 1, %s2
  %s5 = scalar_select 0, %s4, %s2
  $region1: #{tpu_custom_call.1} parent=0
    #allocation2 [shape = 'u8[4096]{0}', space=vmem, size = 0x1000, scoped, tag = 'input window, operand 0, single buffered']
    #allocation3 [shape = 's32[2]{0}', space=sflag, size = 0x8, scoped, tag = 'scoped memory for tpu_custom_call.1']
    #allocation4 [shape = 's32[2]{0}', space=sflag, size = 0x8, scoped, tag = 'scoped memory for tpu_custom_call.1']
    #allocation5 [shape = 'u8[8192]{0}', space=vmem, size = 0x2000, scoped, tag = 'output window, operand 0']
    %6 = vsyncpa [#allocation3], 0
    %7 = vsyncpa [#allocation4], 0
    %s8 = scalar_lea.sflag [#allocation4], 1
    %9 = vsyncpa %s8, 0
    loop: start=0, step=1, limit=4
    $region2: #{tpu_custom_call.1} parent=1 // loop_pre_header
      _
    $region3: #{tpu_custom_call.1} parent=1 // loop_header
      %s11 = sphi 0, %s15
      %p12 = scmp.ge.s32.totalorder %s11, 4
      %s21 = sphi 0, %s23
      %s24 = sphi 0, %s21
      %s25 = sphi 0, %s24
      %s41 = sphi 0, %s25
      %s47 = sphi 0, %s49
      %s50 = sphi 0, %s47
      %s51 = sphi 0, %s50
      %s67 = sphi 0, %s51
    $region4: #{tpu_custom_call.1} parent=1 // loop_header_branch
      %14 = sbr.rel (%p12) target = $region8
    $region5: #{tpu_custom_call.1} parent=1 // loop_body
      %s16 = ssub.s32 %s11, 1
      %s17 = ssub.s32 %s11, 2
      %s18 = sadd.s32 %s11, 1
      %s19 = ssub.s32 %s11, %s18
      %p20 = scmp.eq.s32.totalorder %s19, 0
      %s22 = sadd.s32 %s21, 1
      %s23 = scalar_select %p20, %s21, %s22
      %p26 = pneg %p20
      %p27 = scmp.eq.s32.totalorder %s11, 1
      %p28 = por %p26, %p27
      %p29 = scmp.ne.s32.totalorder %s21, %s24
      %p30 = scmp.eq.s32.totalorder %s11, 0
      %p31 = por %p29, %p30
      %p32 = scmp.ne.s32.totalorder %s21, %s24
      %p33 = scmp.eq.s32.totalorder %s16, 1
      %p34 = por %p32, %p33
      %p35 = scmp.ne.s32.totalorder %s24, %s25
      %p36 = scmp.eq.s32.totalorder %s16, 0
      %p37 = por %p35, %p36
      %p38 = scmp.ne.s32.totalorder %s24, %s25
      %p39 = scmp.eq.s32.totalorder %s17, 1
      %p40 = por %p38, %p39
      %p42 = scmp.ne.s32.totalorder %s25, %s41
      %p43 = scmp.eq.s32.totalorder %s17, 0
      %p44 = por %p42, %p43
      %s45 = ssub.s32 %s11, %s18
      %p46 = scmp.eq.s32.totalorder %s45, 0
      %s48 = sadd.s32 %s47, 1
      %s49 = scalar_select %p46, %s47, %s48
      %p52 = pneg %p46
      %p53 = scmp.eq.s32.totalorder %s11, 1
      %p54 = por %p52, %p53
      %p55 = scmp.ne.s32.totalorder %s47, %s50
      %p56 = scmp.eq.s32.totalorder %s11, 0
      %p57 = por %p55, %p56
      %p58 = scmp.ne.s32.totalorder %s47, %s50
      %p59 = scmp.eq.s32.totalorder %s16, 1
      %p60 = por %p58, %p59
      %p61 = scmp.ne.s32.totalorder %s50, %s51
      %p62 = scmp.eq.s32.totalorder %s16, 0
      %p63 = por %p61, %p62
      %p64 = scmp.ne.s32.totalorder %s50, %s51
      %p65 = scmp.eq.s32.totalorder %s17, 1
      %p66 = por %p64, %p65
      %p68 = scmp.ne.s32.totalorder %s51, %s67
      %p69 = scmp.eq.s32.totalorder %s17, 0
      %p70 = por %p68, %p69
      %p71 = scmp.le.s32.totalorder 1, %s11
      %p72 = scmp.lt.s32.totalorder %s11, 3
      %p73 = pnand %p71, %p72
      %p74 = pneg %p73
      // Predicated region
      $region9: #{tpu_custom_call.1} parent=5 // pred_check
        _
      $region10: #{tpu_custom_call.1} parent=5 // pred_check_branch
        %76 = sbr.rel (%p73) target = $region12
      $region11: #{tpu_custom_call.1} parent=5 // pred_region
        %s77 = ssub.s32 %s11, 1
        // Predicated region
        $region13: #{tpu_custom_call.1} parent=11 // pred_check
          %p78 = pneg %p37
        $region14: #{tpu_custom_call.1} parent=11 // pred_check_branch
          %80 = sbr.rel (%p78) target = $region16
        $region15: #{tpu_custom_call.1} parent=11 // pred_region
          %s82 = ssub.s32 128, 128
          %83 = vsyncadd [#allocation3], %s82
          %s84 = smul.addr %s16, 128
          %s85 = scalar_lea.hbm %s0, %s84
          %s87 = sshll.u32 [#allocation2], 4
          %s88 = int_to_ptr.vmem [resolvable:$true] %s87
          %90 = dma.hbm_to_vmem [thread:$0]  %s85, 128, %s88, [#allocation3]
        $region16: #{tpu_custom_call.1} parent=11 // pred_fallthru
          _
      $region12: #{tpu_custom_call.1} parent=5 // pred_fallthru
        _
      %p91 = scmp.lt.s32.totalorder %s11, 2
      // Predicated region
      $region17: #{tpu_custom_call.1} parent=5 // pred_check
        %p92 = pneg %p91
      $region18: #{tpu_custom_call.1} parent=5 // pred_check_branch
        %94 = sbr.rel (%p92) target = $region20
      $region19: #{tpu_custom_call.1} parent=5 // pred_region
        _
      $region20: #{tpu_custom_call.1} parent=5 // pred_fallthru
        _
      %p95 = scmp.le.s32.totalorder 1, %s11
      %p96 = scmp.lt.s32.totalorder %s11, 3
      %p97 = pnand %p95, %p96
      %p98 = pneg %p97
      // Predicated region
      $region21: #{tpu_custom_call.1} parent=5 // pred_check
        _
      $region22: #{tpu_custom_call.1} parent=5 // pred_check_branch
        %100 = sbr.rel (%p97) target = $region24
      $region23: #{tpu_custom_call.1} parent=5 // pred_region
        %s101 = ssub.s32 %s11, 1
        // Predicated region
        $region25: #{tpu_custom_call.1} parent=23 // pred_check
          %p102 = pneg %p37
        $region26: #{tpu_custom_call.1} parent=23 // pred_check_branch
          %104 = sbr.rel (%p102) target = $region28
        $region27: #{tpu_custom_call.1} parent=23 // pred_region
          %105 = dma.done [#allocation3], 128
        $region28: #{tpu_custom_call.1} parent=23 // pred_fallthru
          _
        %p106 = pneg %p37
        %p107 = pneg %p34
        %p108 = pneg %p63
        %p109 = pneg %p60
        %s110 = sand.u32 %s50, 1
        %s111 = scalar_lea.sflag [#allocation4], %s110
        %s112 = sand.u32 %s50, 1
        %s113 = smul.addr %s112, 8
        %s114 = scalar_lea.vmem [#allocation5], %s113
        %v115 = vld [vmem:[#allocation2] sm:$0xff]
        %v116 = vadd.f32 %v115, 1.0
        %117 = vst [vmem:[%s114] sm:$0xff] %v116
        %s118 = sand.u32 %s50, 1
        %s119 = scalar_lea.sflag [#allocation4], %s118
        %s120 = sand.u32 %s50, 1
        %s121 = smul.addr %s120, 8
        %s122 = scalar_lea.vmem [#allocation5], %s121
        // Predicated region
        $region29: #{tpu_custom_call.1} parent=23 // pred_check
          %p123 = pneg %p60
        $region30: #{tpu_custom_call.1} parent=23 // pred_check_branch
          %125 = sbr.rel (%p123) target = $region32
        $region31: #{tpu_custom_call.1} parent=23 // pred_region
          %s127 = ssub.s32 128, 128
          %128 = vsyncadd %s119, %s127
          %s129 = smul.addr %s16, 128
          %s130 = scalar_lea.hbm %s1, %s129
          %s132 = sshll.u32 %s122, 4
          %s133 = int_to_ptr.vmem [resolvable:$true] %s132
          %135 = dma.vmem_to_hbm [thread:$0]  %s133, 128, %s130, %s119
        $region32: #{tpu_custom_call.1} parent=23 // pred_fallthru
          _
      $region24: #{tpu_custom_call.1} parent=5 // pred_fallthru
        _
      %p136 = scmp.le.s32.totalorder 2, %s11
      // Predicated region
      $region33: #{tpu_custom_call.1} parent=5 // pred_check
        %p137 = pneg %p136
      $region34: #{tpu_custom_call.1} parent=5 // pred_check_branch
        %139 = sbr.rel (%p137) target = $region36
      $region35: #{tpu_custom_call.1} parent=5 // pred_region
        %s140 = ssub.s32 %s11, 2
        // Predicated region
        $region37: #{tpu_custom_call.1} parent=35 // pred_check
          %p141 = pneg %p66
        $region38: #{tpu_custom_call.1} parent=35 // pred_check_branch
          %143 = sbr.rel (%p141) target = $region40
        $region39: #{tpu_custom_call.1} parent=35 // pred_region
          %s144 = sand.u32 %s51, 1
          %s145 = scalar_lea.sflag [#allocation4], %s144
          %s146 = sand.u32 %s51, 1
          %s147 = smul.addr %s146, 8
          %s148 = scalar_lea.vmem [#allocation5], %s147
          %149 = dma.done %s145, 128
        $region40: #{tpu_custom_call.1} parent=35 // pred_fallthru
          _
      $region36: #{tpu_custom_call.1} parent=5 // pred_fallthru
        _
    $region6: #{tpu_custom_call.1} parent=1 // loop_footer
      %s15 = sadd.s32 1, %s11
    $region7: #{tpu_custom_call.1} parent=1 // loop_footer_branch
      %10 = sbr.rel target = $region3
    $region8: #{tpu_custom_call.1} parent=1 // loop_exit
      _
    %150 = vsyncpa [#allocation3], 1
    %s151 = scalar_lea.sflag [#allocation3], 1
    %152 = vsyncpa %s151, 1
    %153 = vsyncpa [#allocation4], 1
    %s154 = scalar_lea.sflag [#allocation4], 1
    %155 = vsyncpa %s154, 1

// kernel: tpu_custom_call.1
$region0: #{tpu_custom_call.1}
  #allocation0 [shape = 'u32[]', space=smem, size = 0x4, offset = 0x4, fixed_abs, tag = 'smem constant byte address 0x4 - core index']
  #allocation1 [shape = 'u32[144,128]{1,0:T(1,128)}', space=vmem, size = 0x12000, scoped, tag = 'internal scratch']
  %s0 = inlined_call_operand.vmem [shape: bf16[8,48], index: 0, kind: input, shape index: {}]
  %s1 = inlined_call_operand.vmem [shape: bf16[48,32], index: 1, kind: input, shape index: {}]
  %s2 = inlined_call_operand.hbm [shape: bf16[8,32], index: 2, kind: output, shape index: {}]
  %s3 = sld [smem:[#allocation0]]
  $region18: #{tpu_custom_call.1} parent=0
    _
  %s5 = ssub.s32 1, %s3
  %s6 = scalar_select 0, %s5, %s3
  $region1: #{tpu_custom_call.1} parent=0
    #allocation2 [shape = 'u8[2048]{0}', space=vmem, size = 0x800, scoped, tag = 'output window, operand 0, single buffered']
    #allocation3 [shape = 's32[1]{0}', space=sflag, size = 0x4, scoped, tag = 'scoped memory for tpu_custom_call.1']
    %7 = vsyncpa [#allocation3], 0
    // Predicated region
    $region2: #{tpu_custom_call.1} parent=1 // pred_check
      _
    $region3: #{tpu_custom_call.1} parent=1 // pred_check_branch
      %9 = sbr.rel (0) target = $region5
    $region4: #{tpu_custom_call.1} parent=1 // pred_region
      _
    $region5: #{tpu_custom_call.1} parent=1 // pred_fallthru
      _
    // Predicated region
    $region6: #{tpu_custom_call.1} parent=1 // pred_check
      _
    $region7: #{tpu_custom_call.1} parent=1 // pred_check_branch
      %11 = sbr.rel (0) target = $region9
    $region8: #{tpu_custom_call.1} parent=1 // pred_region
      _
    $region9: #{tpu_custom_call.1} parent=1 // pred_fallthru
      _
    %v13 = vld [vmem:[%s0] sm:$0xf]
    %v14 = vld [vmem:[%s1] sm:$0xf]
    %v15 = vld [vmem:[%s1 + $0x4] sm:$0xf]
    %v16 = vld [vmem:[%s1 + $0x8] sm:$0xf]
    %v17 = vld [vmem:[%s1 + $0xc] sm:$0xf]
    %v18 = vld [vmem:[%s1 + $0x10] sm:$0xf]
    %v19 = vld [vmem:[%s1 + $0x14] sm:$0xf]
    %v26 = vunpack.c.l.b16 %v14
    %v27 = vunpack.c.l.b16 %v15
    %v28 = vunpack.c.l.b16 %v16
    %v29 = vunpack.c.l.b16 %v17
    %v30 = vunpack.c.l.b16 %v18
    %v31 = vunpack.c.l.b16 %v19
    %v32 = vpack.c.b16 %v27, %v26
    %v33 = vpack.c.b16 %v29, %v28
    %v34 = vpack.c.b16 %v31, %v30
    %vm38 = vcmask 392192
    %v40 = vsel %vm38, %v13, 0
    %42 = vmatprep.subr.bf16.mxu0 0
    %43 = vmatpush1.bf16.msra.mxu0 0
    %44 = vmatprep.subr.bf16.mxu0 0
    %45 = vmatpush1.bf16.msra.mxu0 0
    %46 = vmatprep.subr.bf16.mxu0 0
    %47 = vmatpush1.bf16.msra.mxu0 0
    %48 = vmatprep.subr.bf16.mxu0 0
    %49 = vmatpush1.bf16.msra.mxu0 0
    %50 = vmatprep.subr.bf16.mxu0 0
    %51 = vmatpush1.bf16.msra.mxu0 0
    %52 = vmatprep.subr.bf16.mxu0 0
    %53 = vmatpush1.bf16.msra.mxu0 %v34
    %54 = vmatprep.subr.bf16.mxu0 0
    %55 = vmatpush1.bf16.msra.mxu0 %v33
    %56 = vmatprep.subr.bf16.mxu0 0
    %57 = vmatpush1.bf16.msra.mxu0 %v32
    %58 = vmatprep.subr.bf16.mxu0 0
    %59 = vmatpush2.bf16.msra.mxu0 0
    %60 = vmatprep.subr.bf16.mxu0 0
    %61 = vmatpush2.bf16.msra.mxu0 0
    %62 = vmatprep.subr.bf16.mxu0 0
    %63 = vmatpush2.bf16.msra.mxu0 0
    %64 = vmatprep.subr.bf16.mxu0 0
    %65 = vmatpush2.bf16.msra.mxu0 0
    %66 = vmatprep.subr.bf16.mxu0 0
    %67 = vmatpush2.bf16.msra.mxu0 0
    %68 = vmatprep.subr.bf16.mxu0 0
    %69 = vmatpush2.bf16.msra.mxu0 0
    %70 = vmatprep.subr.bf16.mxu0 0
    %71 = vmatpush2.bf16.msra.mxu0 0
    %72 = vmatprep.subr.bf16.mxu0 0
    %73 = vmatpush2.bf16.msra.mxu0 0
    %74 = vmatprep.mubr.bf16.mxu0 0
    %75 = vmatmul.mubr.bf16.gmra.mxu0 %v40
    %v76 = vpop.f32.mrf.mxu0
    %v77 = vadd.f32 0.0, %v76
    %v78 = vpop.f32.mrf.mxu0
    %v79 = vpop.f32.mrf.mxu0
    %v80 = vpop.f32.mrf.mxu0
    %81 = vdwg.mxu0
    %v82 = vpack.c.bf16 %v77, %v77
    %vm83 = vcmask 257024
    %84 = vst.msk [vmem:[#allocation2] sm:$0xf] %vm83, %v82
    // Predicated region
    $region10: #{tpu_custom_call.1} parent=1 // pred_check
      _
    $region11: #{tpu_custom_call.1} parent=1 // pred_check_branch
      %86 = sbr.rel (0) target = $region13
    $region12: #{tpu_custom_call.1} parent=1 // pred_region
      %s88 = ssub.s32 64, 64
      %89 = vsyncadd [#allocation3], %s88
      %s91 = sshll.u32 [#allocation2], 4
      %s92 = int_to_ptr.vmem [resolvable:$true] %s91
      %94 = dma.vmem_to_hbm [thread:$0]  %s92, 64, %s2, [#allocation3]
    $region13: #{tpu_custom_call.1} parent=1 // pred_fallthru
      _
    // Predicated region
    $region14: #{tpu_custom_call.1} parent=1 // pred_check
      _
    $region15: #{tpu_custom_call.1} parent=1 // pred_check_branch
      %96 = sbr.rel (0) target = $region17
    $region16: #{tpu_custom_call.1} parent=1 // pred_region
      %97 = dma.done [#allocation3], 64
    $region17: #{tpu_custom_call.1} parent=1 // pred_fallthru
      _
    %98 = vsyncpa [#allocation3], 1

</llo_original>
